<compile_context>
chip_gen: v7x
topology: tpu7x:2x2x1
jax: 0.10.0
libtpu: 0.0.40
codegen_flags: <defaults>
</compile_context>

<pallas_src>
import functools
import math

import jax
import jax.numpy as jnp
from jax.experimental import pallas as pl
from jax.experimental.pallas import tpu as pltpu


# ----------------------------- configuration -----------------------------
MIN_LOG_STD = -20.0
MAX_LOG_STD = 2.0
EVALUATE = False          # args.evaluate
WITH_LOGPROB = True       # args.with_logprob
MAX_ACTION = None         # module's max_action (None -> no scaling)

LANE = 128                # vreg lane width
SUBLANE = 8               # f32 sublane count
LOGP_W = LANE             # lane-dense width for the log-prob output


def _round_up(x, m):
    return (x + m - 1) // m * m


# ------------------------------- the kernel -------------------------------
def actor_sac_kernel(state_ref, eps_ref,
                     w1_ref, b1_ref, w2_ref, b2_ref,
                     wh_ref, bh_ref,
                     action_ref, logp_ref,
                     *, n_actions, na_p):
    x = state_ref[...]

    # feature MLP: Linear -> ReLU -> Linear -> ReLU   (zero-padded dims are inert)
    h = jnp.dot(x, w1_ref[...], preferred_element_type=jnp.float32) + b1_ref[...]
    h = jnp.maximum(h, 0.0)
    h = jnp.dot(h, w2_ref[...], preferred_element_type=jnp.float32) + b2_ref[...]
    h = jnp.maximum(h, 0.0)

    # fused heads: one matmul produces [mu | log_std] (each padded to na_p lanes)
    head = jnp.dot(h, wh_ref[...], preferred_element_type=jnp.float32) + bh_ref[...]
    mu = head[:, :na_p]
    log_std = jnp.clip(head[:, na_p:], MIN_LOG_STD, MAX_LOG_STD)
    std = jnp.exp(log_std)

    # reparameterized sample
    eps = eps_ref[...]
    z = mu + std * eps

    if EVALUATE:
        action = jnp.tanh(mu)
    else:
        action = jnp.tanh(z)

    # Normal(mu, std).log_prob(z) - log(1 - action^2 + 1e-7), summed over actions.
    # (z - mu)/std == eps exactly, so use eps directly (no divide).
    normal_lp = -0.5 * eps * eps - log_std - 0.5 * math.log(2.0 * math.pi)
    lp = normal_lp - jnp.log(1.0 - jnp.square(action) + 1e-7)

    # mask off zero-padded action lanes before the row reduction
    lane = jax.lax.broadcasted_iota(jnp.int32, lp.shape, 1)
    lp = jnp.where(lane < n_actions, lp, 0.0)
    lp_sum = jnp.sum(lp, axis=-1, keepdims=True)
    logp_ref[...] = jnp.broadcast_to(lp_sum, logp_ref.shape)

    if MAX_ACTION is not None:
        action = MAX_ACTION * action
    action_ref[...] = action


# ------------------------------- the wrapper -------------------------------
def actor_sac_forward(state, eps, params, *, block_b=512):
    """state: [B, n_states] f32, eps: [B, n_actions] f32 standard-normal noise."""
    B, n_states = state.shape
    n_actions = eps.shape[1]
    hid = params["w1"].shape[1]

    # padded (lane-dense) dimensions
    ns_p = _round_up(n_states, LANE)
    hid_p = _round_up(hid, LANE)
    na_p = _round_up(n_actions, LANE)

    # zero-pad weights/biases; fuse mu/log_std heads into one [hid_p, 2*na_p] matmul
    w1 = jnp.zeros((ns_p, hid_p), jnp.float32).at[:n_states, :hid].set(params["w1"])
    b1 = jnp.zeros((1, hid_p), jnp.float32).at[:, :hid].set(params["b1"])
    w2 = jnp.zeros((hid_p, hid_p), jnp.float32).at[:hid, :hid].set(params["w2"])
    b2 = jnp.zeros((1, hid_p), jnp.float32).at[:, :hid].set(params["b2"])
    wh = jnp.zeros((hid_p, 2 * na_p), jnp.float32)
    wh = wh.at[:hid, :n_actions].set(params["wmu"])
    wh = wh.at[:hid, na_p:na_p + n_actions].set(params["wls"])
    bh = jnp.zeros((1, 2 * na_p), jnp.float32)
    bh = bh.at[:, :n_actions].set(params["bmu"])
    bh = bh.at[:, na_p:na_p + n_actions].set(params["bls"])

    # batch tiling: multiples of 8 rows, tile clamped to the (padded) batch size
    bt = min(block_b, _round_up(B, SUBLANE))
    bt = _round_up(bt, SUBLANE)
    b_p = _round_up(B, bt)

    state_p = jnp.zeros((b_p, ns_p), jnp.float32).at[:B, :n_states].set(state)
    eps_p = jnp.zeros((b_p, na_p), jnp.float32).at[:B, :n_actions].set(eps)

    grid = (b_p // bt,)

    def batch_spec(width):
        return pl.BlockSpec((bt, width), lambda i: (i, 0))

    def const_spec(shape):
        return pl.BlockSpec(shape, lambda i: (0, 0))       # resident across grid

    kernel = functools.partial(actor_sac_kernel, n_actions=n_actions, na_p=na_p)

    action_p, logp_p = pl.pallas_call(
        kernel,
        grid=grid,
        out_shape=(jax.ShapeDtypeStruct((b_p, na_p), jnp.float32),
                   jax.ShapeDtypeStruct((b_p, LOGP_W), jnp.float32)),
        in_specs=[batch_spec(ns_p),                 # state tile
                  batch_spec(na_p),                 # eps tile
                  const_spec((ns_p, hid_p)), const_spec((1, hid_p)),
                  const_spec((hid_p, hid_p)), const_spec((1, hid_p)),
                  const_spec((hid_p, 2 * na_p)), const_spec((1, 2 * na_p))],
        out_specs=(batch_spec(na_p), batch_spec(LOGP_W)),
        compiler_params=pltpu.CompilerParams(
            dimension_semantics=("parallel",)),     # megacore split on v7x
    )(state_p, eps_p, w1, b1, w2, b2, wh, bh)

    action = action_p[:B, :n_actions]
    log_prob = logp_p[:B, :1]

    if not WITH_LOGPROB:
        return action, None
    return action, log_prob


# ---------------------- deterministic parameter setup ----------------------
def init_params(key, n_states, n_actions, hidden_size,
                std=1.0, bias_const=1e-06):
    """Mirrors reset_parameters / reset_single_layer_parameters:
    orthogonal weights (gain=std), constant bias 1e-6. Weights stored [in, out]."""
    ortho = jax.nn.initializers.orthogonal(scale=std)
    k1, k2, k3, k4 = jax.random.split(key, 4)

    def linear(k, fan_in, fan_out):
        # PyTorch weight is (out, in); build it that way then transpose -> (in, out)
        w = ortho(k, (fan_out, fan_in), jnp.float32).T
        b = jnp.full((1, fan_out), bias_const, jnp.float32)
        return w, b

    w1, b1 = linear(k1, n_states, hidden_size)
    w2, b2 = linear(k2, hidden_size, hidden_size)
    wmu, bmu = linear(k3, hidden_size, n_actions)
    wls, bls = linear(k4, hidden_size, n_actions)
    return dict(w1=w1, b1=b1, w2=w2, b2=b2,
                wmu=wmu, bmu=bmu, wls=wls, bls=bls)


# pure-JAX reference for a sanity check
def actor_sac_ref(state, eps, params):
    h = jnp.maximum(state @ params["w1"] + params["b1"], 0.0)
    h = jnp.maximum(h @ params["w2"] + params["b2"], 0.0)
    mu = h @ params["wmu"] + params["bmu"]
    log_std = jnp.clip(h @ params["wls"] + params["bls"], MIN_LOG_STD, MAX_LOG_STD)
    std = jnp.exp(log_std)
    z = mu + std * eps
    action = jnp.tanh(mu) if EVALUATE else jnp.tanh(z)
    lp = (-0.5 * jnp.square((z - mu) / std) - log_std - 0.5 * math.log(2 * math.pi)
          - jnp.log(1 - jnp.square(action) + 1e-7))
    lp = jnp.sum(lp, axis=-1, keepdims=True)
    if MAX_ACTION is not None:
        action = MAX_ACTION * action
    return action, lp


if __name__ == "__main__":
    B, n_states, n_actions, hidden_size = 8, 16, 8, 32

    key = jax.random.PRNGKey(0)
    k_state, k_eps, k_param = jax.random.split(key, 3)

    state = jax.random.normal(k_state, (B, n_states), jnp.float32)
    eps = jax.random.normal(k_eps, (B, n_actions), jnp.float32)  # rsample noise
    params = init_params(k_param, n_states, n_actions, hidden_size)

    action, log_prob = jax.jit(actor_sac_forward)(state, eps, params)
    jax.block_until_ready((action, log_prob))

    # correctness check against pure-JAX reference
    a_ref, lp_ref = actor_sac_ref(state, eps, params)
    assert action.shape == (B, n_actions) and log_prob.shape == (B, 1)
    assert jnp.allclose(action, a_ref, atol=1e-5, rtol=1e-5)
    assert jnp.allclose(log_prob, lp_ref, atol=1e-4, rtol=1e-4)

    print("KERNEL_OK")
</pallas_src>

<mosaic_0001>
module attributes {stable_mosaic.version = 11 : i64} {
  func.func @actor_sac_kernel(%arg0: i32, %arg1: memref<8x128xf32, #tpu.memory_space<vmem>>, %arg2: memref<8x128xf32, #tpu.memory_space<vmem>>, %arg3: memref<128x128xf32, #tpu.memory_space<vmem>>, %arg4: memref<1x128xf32, #tpu.memory_space<vmem>>, %arg5: memref<128x128xf32, #tpu.memory_space<vmem>>, %arg6: memref<1x128xf32, #tpu.memory_space<vmem>>, %arg7: memref<128x256xf32, #tpu.memory_space<vmem>>, %arg8: memref<1x256xf32, #tpu.memory_space<vmem>>, %arg9: memref<8x128xf32, #tpu.memory_space<vmem>>, %arg10: memref<8x128xf32, #tpu.memory_space<vmem>>) attributes {dimension_semantics = [#tpu.dimension_semantics<parallel>], iteration_bounds = array<i64: 1>, scalar_prefetch = 0 : i64, scratch_operands = 0 : i64, tpu.core_type = #tpu.core_type<tc>, window_params = [{transform_indices = @transform_0, window_bounds = array<i64: 8, 128>}, {transform_indices = @transform_1, window_bounds = array<i64: 8, 128>}, {pipeline_mode = #tpu.pipeline_mode<synchronous>, transform_indices = @transform_2, window_bounds = array<i64: 128, 128>}, {pipeline_mode = #tpu.pipeline_mode<synchronous>, transform_indices = @transform_3, window_bounds = array<i64: 1, 128>}, {pipeline_mode = #tpu.pipeline_mode<synchronous>, transform_indices = @transform_4, window_bounds = array<i64: 128, 128>}, {pipeline_mode = #tpu.pipeline_mode<synchronous>, transform_indices = @transform_5, window_bounds = array<i64: 1, 128>}, {pipeline_mode = #tpu.pipeline_mode<synchronous>, transform_indices = @transform_6, window_bounds = array<i64: 128, 256>}, {pipeline_mode = #tpu.pipeline_mode<synchronous>, transform_indices = @transform_7, window_bounds = array<i64: 1, 256>}, {transform_indices = @transform_8, window_bounds = array<i64: 8, 128>}, {transform_indices = @transform_9, window_bounds = array<i64: 8, 128>}]} {
    %c0 = arith.constant 0 : index
    %c0_0 = arith.constant 0 : index
    %0 = vector.load %arg1[%c0, %c0_0] : memref<8x128xf32, #tpu.memory_space<vmem>>, vector<8x128xf32>
    %c0_1 = arith.constant 0 : index
    %c0_2 = arith.constant 0 : index
    %1 = vector.load %arg3[%c0_1, %c0_2] : memref<128x128xf32, #tpu.memory_space<vmem>>, vector<128x128xf32>
    %cst = arith.constant dense<0.000000e+00> : vector<8x128xf32>
    %2 = tpu.matmul %0, %1, %cst {dimension_numbers = #tpu.dot_dimension_numbers<[1], [0], [0], [1], [0, 0, 1, 1], [], []>} : vector<8x128xf32>, vector<128x128xf32>, vector<8x128xf32> -> vector<8x128xf32>
    %c0_3 = arith.constant 0 : index
    %c0_4 = arith.constant 0 : index
    %3 = vector.load %arg4[%c0_3, %c0_4] : memref<1x128xf32, #tpu.memory_space<vmem>>, vector<1x128xf32>
    %4 = vector.broadcast %3 : vector<1x128xf32> to vector<8x128xf32>
    %5 = arith.addf %2, %4 : vector<8x128xf32>
    %cst_5 = arith.constant 0.000000e+00 : f32
    %6 = vector.broadcast %cst_5 : f32 to vector<8x128xf32>
    %7 = arith.maximumf %5, %6 : vector<8x128xf32>
    %c0_6 = arith.constant 0 : index
    %c0_7 = arith.constant 0 : index
    %8 = vector.load %arg5[%c0_6, %c0_7] : memref<128x128xf32, #tpu.memory_space<vmem>>, vector<128x128xf32>
    %cst_8 = arith.constant dense<0.000000e+00> : vector<8x128xf32>
    %9 = tpu.matmul %7, %8, %cst_8 {dimension_numbers = #tpu.dot_dimension_numbers<[1], [0], [0], [1], [0, 0, 1, 1], [], []>} : vector<8x128xf32>, vector<128x128xf32>, vector<8x128xf32> -> vector<8x128xf32>
    %c0_9 = arith.constant 0 : index
    %c0_10 = arith.constant 0 : index
    %10 = vector.load %arg6[%c0_9, %c0_10] : memref<1x128xf32, #tpu.memory_space<vmem>>, vector<1x128xf32>
    %11 = vector.broadcast %10 : vector<1x128xf32> to vector<8x128xf32>
    %12 = arith.addf %9, %11 : vector<8x128xf32>
    %cst_11 = arith.constant 0.000000e+00 : f32
    %13 = vector.broadcast %cst_11 : f32 to vector<8x128xf32>
    %14 = arith.maximumf %12, %13 : vector<8x128xf32>
    %c0_12 = arith.constant 0 : index
    %c0_13 = arith.constant 0 : index
    %15 = vector.load %arg7[%c0_12, %c0_13] : memref<128x256xf32, #tpu.memory_space<vmem>>, vector<128x256xf32>
    %cst_14 = arith.constant dense<0.000000e+00> : vector<8x256xf32>
    %16 = tpu.matmul %14, %15, %cst_14 {dimension_numbers = #tpu.dot_dimension_numbers<[1], [0], [0], [1], [0, 0, 1, 1], [], []>} : vector<8x128xf32>, vector<128x256xf32>, vector<8x256xf32> -> vector<8x256xf32>
    %c0_15 = arith.constant 0 : index
    %c0_16 = arith.constant 0 : index
    %17 = vector.load %arg8[%c0_15, %c0_16] : memref<1x256xf32, #tpu.memory_space<vmem>>, vector<1x256xf32>
    %18 = vector.broadcast %17 : vector<1x256xf32> to vector<8x256xf32>
    %19 = arith.addf %16, %18 : vector<8x256xf32>
    %20 = vector.extract_strided_slice %19 {offsets = [0, 0], sizes = [8, 128], strides = [1, 1]} : vector<8x256xf32> to vector<8x128xf32>
    %21 = vector.extract_strided_slice %19 {offsets = [0, 128], sizes = [8, 128], strides = [1, 1]} : vector<8x256xf32> to vector<8x128xf32>
    %cst_17 = arith.constant -2.000000e+01 : f32
    %cst_18 = arith.constant 2.000000e+00 : f32
    %22 = vector.broadcast %cst_17 : f32 to vector<8x128xf32>
    %23 = arith.maximumf %22, %21 : vector<8x128xf32>
    %24 = vector.broadcast %cst_18 : f32 to vector<8x128xf32>
    %25 = arith.minimumf %24, %23 : vector<8x128xf32>
    %26 = math.exp %25 : vector<8x128xf32>
    %c0_19 = arith.constant 0 : index
    %c0_20 = arith.constant 0 : index
    %27 = vector.load %arg2[%c0_19, %c0_20] : memref<8x128xf32, #tpu.memory_space<vmem>>, vector<8x128xf32>
    %28 = arith.mulf %26, %27 : vector<8x128xf32>
    %29 = arith.addf %20, %28 : vector<8x128xf32>
    %30 = math.tanh %29 : vector<8x128xf32>
    %cst_21 = arith.constant -5.000000e-01 : f32
    %31 = vector.broadcast %cst_21 : f32 to vector<8x128xf32>
    %32 = arith.mulf %31, %27 : vector<8x128xf32>
    %33 = arith.mulf %32, %27 : vector<8x128xf32>
    %34 = arith.subf %33, %25 : vector<8x128xf32>
    %cst_22 = arith.constant 0.918938517 : f32
    %35 = vector.broadcast %cst_22 : f32 to vector<8x128xf32>
    %36 = arith.subf %34, %35 : vector<8x128xf32>
    %37 = arith.mulf %30, %30 : vector<8x128xf32>
    %cst_23 = arith.constant 1.000000e+00 : f32
    %38 = vector.broadcast %cst_23 : f32 to vector<8x128xf32>
    %39 = arith.subf %38, %37 : vector<8x128xf32>
    %cst_24 = arith.constant 1.000000e-07 : f32
    %40 = vector.broadcast %cst_24 : f32 to vector<8x128xf32>
    %41 = arith.addf %39, %40 : vector<8x128xf32>
    %42 = math.log %41 : vector<8x128xf32>
    %43 = arith.subf %36, %42 : vector<8x128xf32>
    %44 = tpu.iota {dimensions = array<i32: 1>} : vector<8x128xi32>
    %c8_i32 = arith.constant 8 : i32
    %45 = vector.broadcast %c8_i32 : i32 to vector<8x128xi32>
    %46 = arith.cmpi slt, %44, %45 : vector<8x128xi32>
    %cst_25 = arith.constant 0.000000e+00 : f32
    %47 = vector.broadcast %cst_25 : f32 to vector<8x128xf32>
    %48 = arith.select %46, %43, %47 : vector<8x128xi1>, vector<8x128xf32>
    %cst_26 = arith.constant dense<0.000000e+00> : vector<8xf32>
    %49 = vector.multi_reduction <add>, %48, %cst_26 [1] : vector<8x128xf32> to vector<8xf32>
    %50 = vector.shape_cast %49 : vector<8xf32> to vector<8x1xf32>
    %51 = vector.shape_cast %50 : vector<8x1xf32> to vector<8x1xf32>
    %52 = vector.broadcast %51 : vector<8x1xf32> to vector<8x128xf32>
    %c0_27 = arith.constant 0 : index
    %c0_28 = arith.constant 0 : index
    %53 = vector.load %arg10[%c0_27, %c0_28] : memref<8x128xf32, #tpu.memory_space<vmem>>, vector<8x128xf32>
    tpu.vector_store %arg10[%c0_27, %c0_28], %52 {strides = array<i32>} : memref<8x128xf32, #tpu.memory_space<vmem>>, vector<8x128xf32>,
    %c0_29 = arith.constant 0 : index
    %c0_30 = arith.constant 0 : index
    %54 = vector.load %arg9[%c0_29, %c0_30] : memref<8x128xf32, #tpu.memory_space<vmem>>, vector<8x128xf32>
    tpu.vector_store %arg9[%c0_29, %c0_30], %30 {strides = array<i32>} : memref<8x128xf32, #tpu.memory_space<vmem>>, vector<8x128xf32>,
    return
  }
  func.func @transform_0(%arg0: i32) -> (i32, i32) {
    %c0_i32 = arith.constant 0 : i32
    %c0_i32_0 = arith.constant 0 : i32
    return %arg0, %c0_i32 : i32, i32
  }
  func.func @transform_1(%arg0: i32) -> (i32, i32) {
    %c0_i32 = arith.constant 0 : i32
    %c0_i32_0 = arith.constant 0 : i32
    return %arg0, %c0_i32 : i32, i32
  }
  func.func @transform_2(%arg0: i32) -> (i32, i32) {
    %c0_i32 = arith.constant 0 : i32
    %c0_i32_0 = arith.constant 0 : i32
    %c0_i32_1 = arith.constant 0 : i32
    return %c0_i32, %c0_i32_0 : i32, i32
  }
  func.func @transform_3(%arg0: i32) -> (i32, i32) {
    %c0_i32 = arith.constant 0 : i32
    %c0_i32_0 = arith.constant 0 : i32
    %c0_i32_1 = arith.constant 0 : i32
    return %c0_i32, %c0_i32_0 : i32, i32
  }
  func.func @transform_4(%arg0: i32) -> (i32, i32) {
    %c0_i32 = arith.constant 0 : i32
    %c0_i32_0 = arith.constant 0 : i32
    %c0_i32_1 = arith.constant 0 : i32
    return %c0_i32, %c0_i32_0 : i32, i32
  }
  func.func @transform_5(%arg0: i32) -> (i32, i32) {
    %c0_i32 = arith.constant 0 : i32
    %c0_i32_0 = arith.constant 0 : i32
    %c0_i32_1 = arith.constant 0 : i32
    return %c0_i32, %c0_i32_0 : i32, i32
  }
  func.func @transform_6(%arg0: i32) -> (i32, i32) {
    %c0_i32 = arith.constant 0 : i32
    %c0_i32_0 = arith.constant 0 : i32
    %c0_i32_1 = arith.constant 0 : i32
    return %c0_i32, %c0_i32_0 : i32, i32
  }
  func.func @transform_7(%arg0: i32) -> (i32, i32) {
    %c0_i32 = arith.constant 0 : i32
    %c0_i32_0 = arith.constant 0 : i32
    %c0_i32_1 = arith.constant 0 : i32
    return %c0_i32, %c0_i32_0 : i32, i32
  }
  func.func @transform_8(%arg0: i32) -> (i32, i32) {
    %c0_i32 = arith.constant 0 : i32
    %c0_i32_0 = arith.constant 0 : i32
    return %arg0, %c0_i32 : i32, i32
  }
  func.func @transform_9(%arg0: i32) -> (i32, i32) {
    %c0_i32 = arith.constant 0 : i32
    %c0_i32_0 = arith.constant 0 : i32
    return %arg0, %c0_i32 : i32, i32
  }
}

</mosaic_0001>

<llo_original>
// kernel: actor_sac_forward.1
$region0: #{actor_sac_forward.1}
  #allocation0 [shape = 'u32[]', space=smem, size = 0x4, offset = 0x4, fixed_abs, tag = 'smem constant byte address 0x4 - core index']
  #allocation1 [shape = 'u32[144,128]{1,0:T(1,128)}', space=vmem, size = 0x12000, scoped, tag = 'internal scratch']
  %s0 = inlined_call_operand.vmem [shape: f32[8,128], index: 0, kind: input, shape index: {}]
  %s1 = inlined_call_operand.vmem [shape: f32[8,128], index: 1, kind: input, shape index: {}]
  %s2 = inlined_call_operand.vmem [shape: f32[128,128], index: 2, kind: input, shape index: {}]
  %s3 = inlined_call_operand.vmem [shape: f32[1,128], index: 3, kind: input, shape index: {}]
  %s4 = inlined_call_operand.vmem [shape: f32[128,128], index: 4, kind: input, shape index: {}]
  %s5 = inlined_call_operand.vmem [shape: f32[1,128], index: 5, kind: input, shape index: {}]
  %s6 = inlined_call_operand.vmem [shape: f32[128,256], index: 6, kind: input, shape index: {}]
  %s7 = inlined_call_operand.vmem [shape: f32[1,256], index: 7, kind: input, shape index: {}]
  %s8 = inlined_call_operand.hbm [shape: f32[8,128], index: 8, kind: output, shape index: {0}]
  %s9 = inlined_call_operand.vmem [shape: f32[8,128], index: 9, kind: output, shape index: {1}]
  %10 = xla_tuple %s8, %s9
  %s11 = sld [smem:[#allocation0]]
  $region50: #{actor_sac_forward.1} parent=0
    _
  %s13 = ssub.s32 1, %s11
  %s14 = scalar_select 0, %s13, %s11
  $region1: #{actor_sac_forward.1} parent=0
    #allocation2 [shape = 'u8[4096]{0}', space=vmem, size = 0x1000, scoped, tag = 'output window, operand 0, single buffered']
    #allocation3 [shape = 's32[1]{0}', space=sflag, size = 0x4, scoped, tag = 'scoped memory for actor_sac_forward.1']
    %15 = vsyncpa [#allocation3], 0
    // Predicated region
    $region2: #{actor_sac_forward.1} parent=1 // pred_check
      _
    $region3: #{actor_sac_forward.1} parent=1 // pred_check_branch
      %17 = sbr.rel (0) target = $region5
    $region4: #{actor_sac_forward.1} parent=1 // pred_region
      _
    $region5: #{actor_sac_forward.1} parent=1 // pred_fallthru
      _
    // Predicated region
    $region6: #{actor_sac_forward.1} parent=1 // pred_check
      _
    $region7: #{actor_sac_forward.1} parent=1 // pred_check_branch
      %19 = sbr.rel (0) target = $region9
    $region8: #{actor_sac_forward.1} parent=1 // pred_region
      _
    $region9: #{actor_sac_forward.1} parent=1 // pred_fallthru
      _
    // Predicated region
    $region10: #{actor_sac_forward.1} parent=1 // pred_check
      _
    $region11: #{actor_sac_forward.1} parent=1 // pred_check_branch
      %21 = sbr.rel (0) target = $region13
    $region12: #{actor_sac_forward.1} parent=1 // pred_region
      _
    $region13: #{actor_sac_forward.1} parent=1 // pred_fallthru
      _
    // Predicated region
    $region14: #{actor_sac_forward.1} parent=1 // pred_check
      _
    $region15: #{actor_sac_forward.1} parent=1 // pred_check_branch
      %23 = sbr.rel (0) target = $region17
    $region16: #{actor_sac_forward.1} parent=1 // pred_region
      _
    $region17: #{actor_sac_forward.1} parent=1 // pred_fallthru
      _
    // Predicated region
    $region18: #{actor_sac_forward.1} parent=1 // pred_check
      _
    $region19: #{actor_sac_forward.1} parent=1 // pred_check_branch
      %25 = sbr.rel (0) target = $region21
    $region20: #{actor_sac_forward.1} parent=1 // pred_region
      _
    $region21: #{actor_sac_forward.1} parent=1 // pred_fallthru
      _
    // Predicated region
    $region22: #{actor_sac_forward.1} parent=1 // pred_check
      _
    $region23: #{actor_sac_forward.1} parent=1 // pred_check_branch
      %27 = sbr.rel (0) target = $region25
    $region24: #{actor_sac_forward.1} parent=1 // pred_region
      _
    $region25: #{actor_sac_forward.1} parent=1 // pred_fallthru
      _
    // Predicated region
    $region26: #{actor_sac_forward.1} parent=1 // pred_check
      _
    $region27: #{actor_sac_forward.1} parent=1 // pred_check_branch
      %29 = sbr.rel (0) target = $region29
    $region28: #{actor_sac_forward.1} parent=1 // pred_region
      _
    $region29: #{actor_sac_forward.1} parent=1 // pred_fallthru
      _
    // Predicated region
    $region30: #{actor_sac_forward.1} parent=1 // pred_check
      _
    $region31: #{actor_sac_forward.1} parent=1 // pred_check_branch
      %31 = sbr.rel (0) target = $region33
    $region32: #{actor_sac_forward.1} parent=1 // pred_region
      _
    $region33: #{actor_sac_forward.1} parent=1 // pred_fallthru
      _
    %v32 = vld [vmem:[%s0] sm:$0xff]
    %v33 = vld [vmem:[%s2] sm:$0xff]
    %v34 = vld [vmem:[%s2 + $0x8] sm:$0xff]
    %v35 = vld [vmem:[%s2 + $0x10] sm:$0xff]
    %v36 = vld [vmem:[%s2 + $0x18] sm:$0xff]
    %v37 = vld [vmem:[%s2 + $0x20] sm:$0xff]
    %v38 = vld [vmem:[%s2 + $0x28] sm:$0xff]
    %v39 = vld [vmem:[%s2 + $0x30] sm:$0xff]
    %v40 = vld [vmem:[%s2 + $0x38] sm:$0xff]
    %v41 = vld [vmem:[%s2 + $0x40] sm:$0xff]
    %v42 = vld [vmem:[%s2 + $0x48] sm:$0xff]
    %v43 = vld [vmem:[%s2 + $0x50] sm:$0xff]
    %v44 = vld [vmem:[%s2 + $0x58] sm:$0xff]
    %v45 = vld [vmem:[%s2 + $0x60] sm:$0xff]
    %v46 = vld [vmem:[%s2 + $0x68] sm:$0xff]
    %v47 = vld [vmem:[%s2 + $0x70] sm:$0xff]
    %v48 = vld [vmem:[%s2 + $0x78] sm:$0xff]
    %v49 = vld [vmem:[%s3] sm:$0x1]
    %v51 = vlaneseq
    %v52 = vshrl.u32 %v51, 7
    %v53 = vsub.s32 0, %v52
    %v54 = vrot.slane %v49, %v53
    %56 = vmatprep.subr.mxu0 0.0
    %57 = vmatpush1.msra.mxu0 %v33
    %58 = vmatprep.subr.mxu0 0.0
    %59 = vmatpush1.msra.mxu0 %v34
    %60 = vmatprep.subr.mxu0 0.0
    %61 = vmatpush1.msra.mxu0 %v35
    %62 = vmatprep.subr.mxu0 0.0
    %63 = vmatpush1.msra.mxu0 %v36
    %64 = vmatprep.subr.mxu0 0.0
    %65 = vmatpush1.msra.mxu0 %v37
    %66 = vmatprep.subr.mxu0 0.0
    %67 = vmatpush1.msra.mxu0 %v38
    %68 = vmatprep.subr.mxu0 0.0
    %69 = vmatpush1.msra.mxu0 %v39
    %70 = vmatprep.subr.mxu0 0.0
    %71 = vmatpush1.msra.mxu0 %v40
    %72 = vmatprep.subr.mxu0 0.0
    %73 = vmatpush1.msra.mxu0 %v41
    %74 = vmatprep.subr.mxu0 0.0
    %75 = vmatpush1.msra.mxu0 %v42
    %76 = vmatprep.subr.mxu0 0.0
    %77 = vmatpush1.msra.mxu0 %v43
    %78 = vmatprep.subr.mxu0 0.0
    %79 = vmatpush1.msra.mxu0 %v44
    %80 = vmatprep.subr.mxu0 0.0
    %81 = vmatpush1.msra.mxu0 %v45
    %82 = vmatprep.subr.mxu0 0.0
    %83 = vmatpush1.msra.mxu0 %v46
    %84 = vmatprep.subr.mxu0 0.0
    %85 = vmatpush1.msra.mxu0 %v47
    %86 = vmatprep.subr.mxu0 0.0
    %87 = vmatpush1.msra.mxu0 %v48
    %88 = vmatprep.subr.mxu0 0.0
    %89 = vmatpush1.msra.mxu0 0.0
    %90 = vmatprep.subr.mxu0 0.0
    %91 = vmatpush1.msra.mxu0 0.0
    %92 = vmatprep.subr.mxu0 0.0
    %93 = vmatpush1.msra.mxu0 0.0
    %94 = vmatprep.subr.mxu0 0.0
    %95 = vmatpush1.msra.mxu0 0.0
    %96 = vmatprep.subr.mxu0 0.0
    %97 = vmatpush1.msra.mxu0 0.0
    %98 = vmatprep.subr.mxu0 0.0
    %99 = vmatpush1.msra.mxu0 0.0
    %100 = vmatprep.subr.mxu0 0.0
    %101 = vmatpush1.msra.mxu0 0.0
    %102 = vmatprep.subr.mxu0 0.0
    %103 = vmatpush1.msra.mxu0 0.0
    %104 = vmatprep.subr.mxu0 0.0
    %105 = vmatpush1.msra.mxu0 0.0
    %106 = vmatprep.subr.mxu0 0.0
    %107 = vmatpush1.msra.mxu0 0.0
    %108 = vmatprep.subr.mxu0 0.0
    %109 = vmatpush1.msra.mxu0 0.0
    %110 = vmatprep.subr.mxu0 0.0
    %111 = vmatpush1.msra.mxu0 0.0
    %112 = vmatprep.subr.mxu0 0.0
    %113 = vmatpush1.msra.mxu0 0.0
    %114 = vmatprep.subr.mxu0 0.0
    %115 = vmatpush1.msra.mxu0 0.0
    %116 = vmatprep.subr.mxu0 0.0
    %117 = vmatpush1.msra.mxu0 0.0
    %118 = vmatprep.subr.mxu0 0.0
    %119 = vmatpush1.msra.mxu0 0.0
    %120 = vmatprep.mubr.f32.mxu0 0.0
    %121 = vmatmul.mubr.f32.gmra.mrb[0].mxu0 %v32
    %v122 = vpop.f32.mrb[0].mxu0
    %v123 = vadd.f32 %v54, %v122
    %v124 = vpop.f32.mrb[0].mxu0
    %125 = vdwg.mxu0
    %v126 = vmax.f32 %v123, 0.0
    %v127 = vld [vmem:[%s4] sm:$0xff]
    %v128 = vld [vmem:[%s4 + $0x8] sm:$0xff]
    %v129 = vld [vmem:[%s4 + $0x10] sm:$0xff]
    %v130 = vld [vmem:[%s4 + $0x18] sm:$0xff]
    %v131 = vld [vmem:[%s4 + $0x20] sm:$0xff]
    %v132 = vld [vmem:[%s4 + $0x28] sm:$0xff]
    %v133 = vld [vmem:[%s4 + $0x30] sm:$0xff]
    %v134 = vld [vmem:[%s4 + $0x38] sm:$0xff]
    %v135 = vld [vmem:[%s4 + $0x40] sm:$0xff]
    %v136 = vld [vmem:[%s4 + $0x48] sm:$0xff]
    %v137 = vld [vmem:[%s4 + $0x50] sm:$0xff]
    %v138 = vld [vmem:[%s4 + $0x58] sm:$0xff]
    %v139 = vld [vmem:[%s4 + $0x60] sm:$0xff]
    %v140 = vld [vmem:[%s4 + $0x68] sm:$0xff]
    %v141 = vld [vmem:[%s4 + $0x70] sm:$0xff]
    %v142 = vld [vmem:[%s4 + $0x78] sm:$0xff]
    %v143 = vld [vmem:[%s5] sm:$0x1]
    %v145 = vlaneseq
    %v146 = vshrl.u32 %v145, 7
    %v147 = vsub.s32 0, %v146
    %v148 = vrot.slane %v143, %v147
    %150 = vmatprep.subr.mxu0 0.0
    %151 = vmatpush1.msra.mxu0 %v127
    %152 = vmatprep.subr.mxu0 0.0
    %153 = vmatpush1.msra.mxu0 %v128
    %154 = vmatprep.subr.mxu0 0.0
    %155 = vmatpush1.msra.mxu0 %v129
    %156 = vmatprep.subr.mxu0 0.0
    %157 = vmatpush1.msra.mxu0 %v130
    %158 = vmatprep.subr.mxu0 0.0
    %159 = vmatpush1.msra.mxu0 %v131
    %160 = vmatprep.subr.mxu0 0.0
    %161 = vmatpush1.msra.mxu0 %v132
    %162 = vmatprep.subr.mxu0 0.0
    %163 = vmatpush1.msra.mxu0 %v133
    %164 = vmatprep.subr.mxu0 0.0
    %165 = vmatpush1.msra.mxu0 %v134
    %166 = vmatprep.subr.mxu0 0.0
    %167 = vmatpush1.msra.mxu0 %v135
    %168 = vmatprep.subr.mxu0 0.0
    %169 = vmatpush1.msra.mxu0 %v136
    %170 = vmatprep.subr.mxu0 0.0
    %171 = vmatpush1.msra.mxu0 %v137
    %172 = vmatprep.subr.mxu0 0.0
    %173 = vmatpush1.msra.mxu0 %v138
    %174 = vmatprep.subr.mxu0 0.0
    %175 = vmatpush1.msra.mxu0 %v139
    %176 = vmatprep.subr.mxu0 0.0
    %177 = vmatpush1.msra.mxu0 %v140
    %178 = vmatprep.subr.mxu0 0.0
    %179 = vmatpush1.msra.mxu0 %v141
    %180 = vmatprep.subr.mxu0 0.0
    %181 = vmatpush1.msra.mxu0 %v142
    %182 = vmatprep.subr.mxu0 0.0
    %183 = vmatpush1.msra.mxu0 0.0
    %184 = vmatprep.subr.mxu0 0.0
    %185 = vmatpush1.msra.mxu0 0.0
    %186 = vmatprep.subr.mxu0 0.0
    %187 = vmatpush1.msra.mxu0 0.0
    %188 = vmatprep.subr.mxu0 0.0
    %189 = vmatpush1.msra.mxu0 0.0
    %190 = vmatprep.subr.mxu0 0.0
    %191 = vmatpush1.msra.mxu0 0.0
    %192 = vmatprep.subr.mxu0 0.0
    %193 = vmatpush1.msra.mxu0 0.0
    %194 = vmatprep.subr.mxu0 0.0
    %195 = vmatpush1.msra.mxu0 0.0
    %196 = vmatprep.subr.mxu0 0.0
    %197 = vmatpush1.msra.mxu0 0.0
    %198 = vmatprep.subr.mxu0 0.0
    %199 = vmatpush1.msra.mxu0 0.0
    %200 = vmatprep.subr.mxu0 0.0
    %201 = vmatpush1.msra.mxu0 0.0
    %202 = vmatprep.subr.mxu0 0.0
    %203 = vmatpush1.msra.mxu0 0.0
    %204 = vmatprep.subr.mxu0 0.0
    %205 = vmatpush1.msra.mxu0 0.0
    %206 = vmatprep.subr.mxu0 0.0
    %207 = vmatpush1.msra.mxu0 0.0
    %208 = vmatprep.subr.mxu0 0.0
    %209 = vmatpush1.msra.mxu0 0.0
    %210 = vmatprep.subr.mxu0 0.0
    %211 = vmatpush1.msra.mxu0 0.0
    %212 = vmatprep.subr.mxu0 0.0
    %213 = vmatpush1.msra.mxu0 0.0
    %214 = vmatprep.mubr.f32.mxu0 0.0
    %215 = vmatmul.mubr.f32.gmra.mrb[0].mxu0 %v126
    %v216 = vpop.f32.mrb[0].mxu0
    %v217 = vadd.f32 %v148, %v216
    %v218 = vpop.f32.mrb[0].mxu0
    %219 = vdwg.mxu0
    %v220 = vmax.f32 %v217, 0.0
    %v221 = vld [vmem:[%s6] sm:$0xff]
    %v222 = vld [vmem:[%s6 + $0x8] sm:$0xff]
    %v223 = vld [vmem:[%s6 + $0x10] sm:$0xff]
    %v224 = vld [vmem:[%s6 + $0x18] sm:$0xff]
    %v225 = vld [vmem:[%s6 + $0x20] sm:$0xff]
    %v226 = vld [vmem:[%s6 + $0x28] sm:$0xff]
    %v227 = vld [vmem:[%s6 + $0x30] sm:$0xff]
    %v228 = vld [vmem:[%s6 + $0x38] sm:$0xff]
    %v229 = vld [vmem:[%s6 + $0x40] sm:$0xff]
    %v230 = vld [vmem:[%s6 + $0x48] sm:$0xff]
    %v231 = vld [vmem:[%s6 + $0x50] sm:$0xff]
    %v232 = vld [vmem:[%s6 + $0x58] sm:$0xff]
    %v233 = vld [vmem:[%s6 + $0x60] sm:$0xff]
    %v234 = vld [vmem:[%s6 + $0x68] sm:$0xff]
    %v235 = vld [vmem:[%s6 + $0x70] sm:$0xff]
    %v236 = vld [vmem:[%s6 + $0x78] sm:$0xff]
    %v237 = vld [vmem:[%s6 + $0x80] sm:$0xff]
    %v238 = vld [vmem:[%s6 + $0x88] sm:$0xff]
    %v239 = vld [vmem:[%s6 + $0x90] sm:$0xff]
    %v240 = vld [vmem:[%s6 + $0x98] sm:$0xff]
    %v241 = vld [vmem:[%s6 + $0xa0] sm:$0xff]
    %v242 = vld [vmem:[%s6 + $0xa8] sm:$0xff]
    %v243 = vld [vmem:[%s6 + $0xb0] sm:$0xff]
    %v244 = vld [vmem:[%s6 + $0xb8] sm:$0xff]
    %v245 = vld [vmem:[%s6 + $0xc0] sm:$0xff]
    %v246 = vld [vmem:[%s6 + $0xc8] sm:$0xff]
    %v247 = vld [vmem:[%s6 + $0xd0] sm:$0xff]
    %v248 = vld [vmem:[%s6 + $0xd8] sm:$0xff]
    %v249 = vld [vmem:[%s6 + $0xe0] sm:$0xff]
    %v250 = vld [vmem:[%s6 + $0xe8] sm:$0xff]
    %v251 = vld [vmem:[%s6 + $0xf0] sm:$0xff]
    %v252 = vld [vmem:[%s6 + $0xf8] sm:$0xff]
    %v253 = vld [vmem:[%s7] sm:$0x3]
    %v255 = vlaneseq
    %v256 = vshrl.u32 %v255, 7
    %v257 = vsub.s32 0, %v256
    %v258 = vrot.slane %v253, %v257
    %v259 = vlaneseq
    %v260 = vshrl.u32 %v259, 7
    %v261 = vsub.s32 1, %v260
    %v262 = vrot.slane %v253, %v261
    %265 = vmatprep.subr.mxu0 %v222
    %266 = vmatpush1.msra.mxu0 %v221
    %267 = vmatprep.subr.mxu0 %v224
    %268 = vmatpush1.msra.mxu0 %v223
    %269 = vmatprep.subr.mxu0 %v226
    %270 = vmatpush1.msra.mxu0 %v225
    %271 = vmatprep.subr.mxu0 %v228
    %272 = vmatpush1.msra.mxu0 %v227
    %273 = vmatprep.subr.mxu0 %v230
    %274 = vmatpush1.msra.mxu0 %v229
    %275 = vmatprep.subr.mxu0 %v232
    %276 = vmatpush1.msra.mxu0 %v231
    %277 = vmatprep.subr.mxu0 %v234
    %278 = vmatpush1.msra.mxu0 %v233
    %279 = vmatprep.subr.mxu0 %v236
    %280 = vmatpush1.msra.mxu0 %v235
    %281 = vmatprep.subr.mxu0 %v238
    %282 = vmatpush1.msra.mxu0 %v237
    %283 = vmatprep.subr.mxu0 %v240
    %284 = vmatpush1.msra.mxu0 %v239
    %285 = vmatprep.subr.mxu0 %v242
    %286 = vmatpush1.msra.mxu0 %v241
    %287 = vmatprep.subr.mxu0 %v244
    %288 = vmatpush1.msra.mxu0 %v243
    %289 = vmatprep.subr.mxu0 %v246
    %290 = vmatpush1.msra.mxu0 %v245
    %291 = vmatprep.subr.mxu0 %v248
    %292 = vmatpush1.msra.mxu0 %v247
    %293 = vmatprep.subr.mxu0 %v250
    %294 = vmatpush1.msra.mxu0 %v249
    %295 = vmatprep.subr.mxu0 %v252
    %296 = vmatpush1.msra.mxu0 %v251
    %297 = vmatprep.subr.mxu0 0.0
    %298 = vmatpush1.msra.mxu0 0.0
    %299 = vmatprep.subr.mxu0 0.0
    %300 = vmatpush1.msra.mxu0 0.0
    %301 = vmatprep.subr.mxu0 0.0
    %302 = vmatpush1.msra.mxu0 0.0
    %303 = vmatprep.subr.mxu0 0.0
    %304 = vmatpush1.msra.mxu0 0.0
    %305 = vmatprep.subr.mxu0 0.0
    %306 = vmatpush1.msra.mxu0 0.0
    %307 = vmatprep.subr.mxu0 0.0
    %308 = vmatpush1.msra.mxu0 0.0
    %309 = vmatprep.subr.mxu0 0.0
    %310 = vmatpush1.msra.mxu0 0.0
    %311 = vmatprep.subr.mxu0 0.0
    %312 = vmatpush1.msra.mxu0 0.0
    %313 = vmatprep.subr.mxu0 0.0
    %314 = vmatpush1.msra.mxu0 0.0
    %315 = vmatprep.subr.mxu0 0.0
    %316 = vmatpush1.msra.mxu0 0.0
    %317 = vmatprep.subr.mxu0 0.0
    %318 = vmatpush1.msra.mxu0 0.0
    %319 = vmatprep.subr.mxu0 0.0
    %320 = vmatpush1.msra.mxu0 0.0
    %321 = vmatprep.subr.mxu0 0.0
    %322 = vmatpush1.msra.mxu0 0.0
    %323 = vmatprep.subr.mxu0 0.0
    %324 = vmatpush1.msra.mxu0 0.0
    %325 = vmatprep.subr.mxu0 0.0
    %326 = vmatpush1.msra.mxu0 0.0
    %327 = vmatprep.subr.mxu0 0.0
    %328 = vmatpush1.msra.mxu0 0.0
    %329 = vmatprep.mubr.f32.mxu0 0.0
    %330 = vmatmul.mubr.f32.gmra.mrb[0].mxu0 %v220
    %v331 = vpop.f32.mrb[0].mxu0
    %v332 = vadd.f32 %v258, %v331
    %v333 = vpop.f32.mrb[0].mxu0
    %v334 = vadd.f32 %v262, %v333
    %335 = vdwg.mxu0
    %v336 = vmax.f32 %v334, -20.0
    %v337 = vmin.f32 %v336, 2.0
    %v338 = vmul.f32 %v337, 1.442695
    %v339 = vpow.pop %v338
    %v340 = vld [vmem:[%s1] sm:$0xff]
    %v341 = vmul.f32 %v339, %v340
    %v342 = vadd.f32 %v332, %v341
    %v343 = vtanh.pop %v342
    %v344 = vmul.f32 %v340, -0.5
    %v345 = vmul.f32 %v344, %v340
    %v346 = vsub.f32 %v345, %v337
    %v347 = vsub.f32 %v346, 0.9189385
    %v348 = vmul.f32 %v343, %v343
    %v349 = vsub.f32 1.0, %v348
    %v350 = vadd.f32 %v349, 1e-07
    %v351 = vlog2.pop %v350
    %v352 = vmul.f32 %v351, 0.6931472
    %v353 = vsub.f32 %v347, %v352
    %v354 = vlaneseq
    %v355 = vand.u32 %v354, 127
    %vm356 = vcmp.lt.s32.totalorder %v355, 8
    %v357 = vsel %vm356, %v353, 0.0
    %358 = vadd.xlane.f32.xlu0 %v357
    %v359 = vpop.xlane.xlu0 %358
    %360 = vst [vmem:[%s9] sm:$0xff] %v359
    %361 = vst [vmem:[#allocation2] sm:$0xff] %v343
    // Predicated region
    $region34: #{actor_sac_forward.1} parent=1 // pred_check
      _
    $region35: #{actor_sac_forward.1} parent=1 // pred_check_branch
      %363 = sbr.rel (0) target = $region37
    $region36: #{actor_sac_forward.1} parent=1 // pred_region
      %s365 = ssub.s32 128, 128
      %366 = vsyncadd [#allocation3], %s365
      %s368 = sshll.u32 [#allocation2], 4
      %s369 = int_to_ptr.vmem [resolvable:$true] %s368
      %371 = dma.vmem_to_hbm [thread:$0]  %s369, 128, %s8, [#allocation3]
    $region37: #{actor_sac_forward.1} parent=1 // pred_fallthru
      _
    // Predicated region
    $region38: #{actor_sac_forward.1} parent=1 // pred_check
      _
    $region39: #{actor_sac_forward.1} parent=1 // pred_check_branch
      %373 = sbr.rel (0) target = $region41
    $region40: #{actor_sac_forward.1} parent=1 // pred_region
      _
    $region41: #{actor_sac_forward.1} parent=1 // pred_fallthru
      _
    // Predicated region
    $region42: #{actor_sac_forward.1} parent=1 // pred_check
      _
    $region43: #{actor_sac_forward.1} parent=1 // pred_check_branch
      %375 = sbr.rel (0) target = $region45
    $region44: #{actor_sac_forward.1} parent=1 // pred_region
      %376 = dma.done [#allocation3], 128
    $region45: #{actor_sac_forward.1} parent=1 // pred_fallthru
      _
    // Predicated region
    $region46: #{actor_sac_forward.1} parent=1 // pred_check
      _
    $region47: #{actor_sac_forward.1} parent=1 // pred_check_branch
      %378 = sbr.rel (0) target = $region49
    $region48: #{actor_sac_forward.1} parent=1 // pred_region
      _
    $region49: #{actor_sac_forward.1} parent=1 // pred_fallthru
      _
    %379 = vsyncpa [#allocation3], 1

</llo_original>
